<compile_context>
chip_gen: v7x
topology: tpu7x:2x2x1
jax: 0.10.0
libtpu: 0.0.40
codegen_flags: <defaults>
</compile_context>

<pallas_src>
import jax
import jax.numpy as jnp
from jax.experimental import pallas as pl
from jax.experimental.pallas import tpu as pltpu


def init_prompts_buffer(token_prefix, token_suffix, n_ctx, dtype=None):
    """One-time (init / reset_classnames) construction of the persistent prompts buffer.

    Rows [0:1)       = token_prefix  (frozen SOS embedding)
    Rows [1:1+n_ctx) = placeholder   (overwritten by the forward kernel every call)
    Rows [1+n_ctx:T) = token_suffix  (frozen "classname . <pad>" embeddings)
    """
    if dtype is None:
        dtype = token_prefix.dtype
    n_cls, one, D = token_prefix.shape
    assert one == 1
    filler = jnp.zeros((n_cls, n_ctx, D), dtype)
    return jnp.concatenate(
        [token_prefix.astype(dtype), filler, token_suffix.astype(dtype)], axis=1)


def _make_ctx_update_kernel(n_cls, n_ctx, per_class_ctx):
    """Kernel: overwrite ONLY the learnable-context rows [1 : 1+n_ctx) of every class."""

    def kernel(ctx_ref, buf_ref, out_ref, ctx_stage, sems):
        del buf_ref  # present only to establish input->output aliasing of the HBM buffer
        # Stage the (dtype-cast) learnable context once in VMEM; all per-class DMAs read it.
        ctx_stage[...] = ctx_ref[...].astype(ctx_stage.dtype)

        def dma(i):
            src = ctx_stage.at[i] if per_class_ctx else ctx_stage
            dst = out_ref.at[i, pl.ds(1, n_ctx), :]   # contiguous rows [1, 1+n_ctx) of class i
            return pltpu.make_async_copy(src, dst, sems.at[i])

        # Issue all per-class DMAs, then wait for all of them.
        # Static unroll: n_cls is small (~10-100 classes for TPT/biomed datasets).
        for i in range(n_cls):
            dma(i).start()
        for i in range(n_cls):
            dma(i).wait()

    return kernel


def prompt_learner_forward(ctx, prompts_buf, n_ctx):
    """PromptLearner.forward() for class_token_position='end', learned_cls=False.

    ctx         : [n_ctx, D] (shared) or [n_cls, n_ctx, D] (per-class, e.g. forward(init=...))
    prompts_buf : [n_cls, T, D] persistent buffer with frozen prefix/suffix rows pre-filled
                  (built once by `init_prompts_buffer`; thread the returned prompts back in
                  as the buffer for the next call — frozen rows are never touched).
    returns     : [n_cls, T, D] prompts (aliased, in-place update of prompts_buf).
    """
    n_cls, T, D = prompts_buf.shape
    out_dtype = prompts_buf.dtype
    assert T >= 1 + n_ctx

    if jnp.dtype(out_dtype).itemsize < 4:
        # TODO(synk): 16-bit prompt buffers need a packed-u32 DMA for the odd row offset.
        raise NotImplementedError("sub-32-bit prompts buffer not supported yet")

    if ctx.ndim == 2:                       # shared context (default forward())
        assert ctx.shape == (n_ctx, D)
        per_class = False
        stage_shape = (n_ctx, D)
    elif ctx.ndim == 3:                     # per-class context (forward(init=...))
        assert ctx.shape == (n_cls, n_ctx, D)
        per_class = True
        stage_shape = (n_cls, n_ctx, D)
    else:
        # TODO(synk): batch_size-repeat 4-D ctx path not implemented.
        raise NotImplementedError("4-D (batched) ctx not supported yet")

    ctx_nd = ctx.ndim
    bytes_accessed = (ctx.size * jnp.dtype(ctx.dtype).itemsize
                      + n_cls * n_ctx * D * jnp.dtype(out_dtype).itemsize)

    return pl.pallas_call(
        _make_ctx_update_kernel(n_cls, n_ctx, per_class),
        out_shape=jax.ShapeDtypeStruct((n_cls, T, D), out_dtype),
        grid=(1,),
        in_specs=[
            pl.BlockSpec(ctx.shape, lambda i: (0,) * ctx_nd),  # whole ctx staged in VMEM
            pl.BlockSpec(memory_space=pl.ANY),                 # persistent prompts buffer (HBM)
        ],
        out_specs=pl.BlockSpec(memory_space=pl.ANY),           # aliased to the buffer
        scratch_shapes=[
            pltpu.VMEM(stage_shape, out_dtype),                # dtype-cast ctx staging
            pltpu.SemaphoreType.DMA((n_cls,)),                 # one DMA sem per class
        ],
        input_output_aliases={1: 0},                           # prompts_buf <-> output
        compiler_params=pltpu.CompilerParams(dimension_semantics=("arbitrary",)),
        cost_estimate=pl.CostEstimate(flops=0, transcendentals=0,
                                      bytes_accessed=bytes_accessed),
    )(ctx, prompts_buf)


if __name__ == "__main__":
    # Small shapes, structurally identical to the module
    # (real model: n_ctx=16, ctx_dim=768, context_length=256).
    n_cls = 4
    n_ctx = 16
    ctx_dim = 128                 # multiple of 128 lanes (real: 768 = 6*128)
    context_length = 32           # total tokens per prompt (real: 256)

    key = jax.random.PRNGKey(0)
    k_ctx, k_emb = jax.random.split(key)

    # nn.init.normal_(ctx_vectors, std=0.02)
    ctx = (0.02 * jax.random.normal(k_ctx, (n_ctx, ctx_dim))).astype(jnp.float32)

    # Stand-in for the frozen text-tower token embeddings of the tokenized prompts.
    embedding = jax.random.normal(k_emb, (n_cls, context_length, ctx_dim), jnp.float32)
    token_prefix = embedding[:, :1, :]                 # SOS
    token_suffix = embedding[:, 1 + n_ctx:, :]         # classname + '.' + padding

    # Init-time: build the persistent prompts buffer once (frozen rows pre-filled).
    prompts_buf = init_prompts_buffer(token_prefix, token_suffix, n_ctx)

    # Donate the buffer so the pallas input_output_aliases becomes a true in-place update.
    fwd = jax.jit(prompt_learner_forward, static_argnums=(2,), donate_argnums=(1,))

    # --- 1) shared 2-D ctx (default forward()) --------------------------------------
    prompts = fwd(ctx, prompts_buf, n_ctx)
    jax.block_until_ready(prompts)
    ref = jnp.concatenate(
        [token_prefix,
         jnp.broadcast_to(ctx[None], (n_cls, n_ctx, ctx_dim)),
         token_suffix], axis=1)
    assert prompts.shape == (n_cls, context_length, ctx_dim)
    assert bool(jnp.array_equal(prompts, ref))

    # --- 2) per-class 3-D ctx (forward(init=...)); thread the persistent buffer -----
    ctx3 = ctx[None] * (1.0 + jnp.arange(n_cls, dtype=jnp.float32))[:, None, None]
    prompts3 = fwd(ctx3, prompts, n_ctx)   # previous prompts re-used as the buffer
    jax.block_until_ready(prompts3)
    ref3 = jnp.concatenate([token_prefix, ctx3, token_suffix], axis=1)
    assert bool(jnp.array_equal(prompts3, ref3))

    # --- 3) mixed dtypes: bf16 learnable ctx cast into the f32 prompts buffer -------
    ctx_bf16 = ctx.astype(jnp.bfloat16)
    prompts_b = fwd(ctx_bf16, prompts3, n_ctx)
    jax.block_until_ready(prompts_b)
    ref_b = jnp.concatenate(
        [token_prefix,
         jnp.broadcast_to(ctx_bf16.astype(jnp.float32)[None], (n_cls, n_ctx, ctx_dim)),
         token_suffix], axis=1)
    assert bool(jnp.array_equal(prompts_b, ref_b))

    print("KERNEL_OK")
</pallas_src>

<mosaic_0001>
module attributes {stable_mosaic.version = 11 : i64} {
  func.func @kernel(%arg0: i32, %arg1: memref<16x128xf32, #tpu.memory_space<vmem>>, %arg2: memref<4x32x128xf32, #tpu.memory_space<any>>, %arg3: memref<4x32x128xf32, #tpu.memory_space<any>>, %arg4: memref<16x128xf32, #tpu.memory_space<vmem>>, %arg5: memref<4x!tpu.dma_semaphore, #tpu.memory_space<semaphore_mem>>) attributes {dimension_semantics = [#tpu.dimension_semantics<arbitrary>], iteration_bounds = array<i64: 1>, scalar_prefetch = 0 : i64, scratch_operands = 2 : i64, tpu.core_type = #tpu.core_type<tc>, window_params = [{pipeline_mode = #tpu.pipeline_mode<synchronous>, transform_indices = @transform_0, window_bounds = array<i64: 16, 128>}, {}, {}]} {
    %c0 = arith.constant 0 : index
    %c0_0 = arith.constant 0 : index
    %0 = vector.load %arg1[%c0, %c0_0] : memref<16x128xf32, #tpu.memory_space<vmem>>, vector<16x128xf32>
    %c0_1 = arith.constant 0 : index
    %c0_2 = arith.constant 0 : index
    %1 = vector.load %arg4[%c0_1, %c0_2] : memref<16x128xf32, #tpu.memory_space<vmem>>, vector<16x128xf32>
    tpu.vector_store %arg4[%c0_1, %c0_2], %0 {strides = array<i32>} : memref<16x128xf32, #tpu.memory_space<vmem>>, vector<16x128xf32>,
    %c0_i32 = arith.constant 0 : i32
    %c0_i32_3 = arith.constant 0 : i32
    %c1_i32 = arith.constant 1 : i32
    %c0_i32_4 = arith.constant 0 : i32
    %2 = tpu.memref_slice %arg3[%c0_i32, %c1_i32, %c0_i32_4] : memref<4x32x128xf32, #tpu.memory_space<any>> -> memref<1x16x128xf32, #tpu.memory_space<any>>
    %3 = tpu.memref_squeeze %2 : memref<1x16x128xf32, #tpu.memory_space<any>> -> memref<16x128xf32, #tpu.memory_space<any>>
    %4 = tpu.memref_slice %arg5[%c0_i32_3] : memref<4x!tpu.dma_semaphore, #tpu.memory_space<semaphore_mem>> -> memref<1x!tpu.dma_semaphore, #tpu.memory_space<semaphore_mem>>
    %5 = tpu.memref_squeeze %4 : memref<1x!tpu.dma_semaphore, #tpu.memory_space<semaphore_mem>> -> memref<!tpu.dma_semaphore, #tpu.memory_space<semaphore_mem>>
    tpu.enqueue_dma source(%arg4 : memref<16x128xf32, #tpu.memory_space<vmem>>) target(%3 : memref<16x128xf32, #tpu.memory_space<any>>) target_semaphore(%5 : memref<!tpu.dma_semaphore, #tpu.memory_space<semaphore_mem>>)
    %c1_i32_5 = arith.constant 1 : i32
    %c1_i32_6 = arith.constant 1 : i32
    %c1_i32_7 = arith.constant 1 : i32
    %c0_i32_8 = arith.constant 0 : i32
    %6 = tpu.memref_slice %arg3[%c1_i32_5, %c1_i32_7, %c0_i32_8] : memref<4x32x128xf32, #tpu.memory_space<any>> -> memref<1x16x128xf32, #tpu.memory_space<any>>
    %7 = tpu.memref_squeeze %6 : memref<1x16x128xf32, #tpu.memory_space<any>> -> memref<16x128xf32, #tpu.memory_space<any>>
    %8 = tpu.memref_slice %arg5[%c1_i32_6] : memref<4x!tpu.dma_semaphore, #tpu.memory_space<semaphore_mem>> -> memref<1x!tpu.dma_semaphore, #tpu.memory_space<semaphore_mem>>
    %9 = tpu.memref_squeeze %8 : memref<1x!tpu.dma_semaphore, #tpu.memory_space<semaphore_mem>> -> memref<!tpu.dma_semaphore, #tpu.memory_space<semaphore_mem>>
    tpu.enqueue_dma source(%arg4 : memref<16x128xf32, #tpu.memory_space<vmem>>) target(%7 : memref<16x128xf32, #tpu.memory_space<any>>) target_semaphore(%9 : memref<!tpu.dma_semaphore, #tpu.memory_space<semaphore_mem>>)
    %c2_i32 = arith.constant 2 : i32
    %c2_i32_9 = arith.constant 2 : i32
    %c1_i32_10 = arith.constant 1 : i32
    %c0_i32_11 = arith.constant 0 : i32
    %10 = tpu.memref_slice %arg3[%c2_i32, %c1_i32_10, %c0_i32_11] : memref<4x32x128xf32, #tpu.memory_space<any>> -> memref<1x16x128xf32, #tpu.memory_space<any>>
    %11 = tpu.memref_squeeze %10 : memref<1x16x128xf32, #tpu.memory_space<any>> -> memref<16x128xf32, #tpu.memory_space<any>>
    %12 = tpu.memref_slice %arg5[%c2_i32_9] : memref<4x!tpu.dma_semaphore, #tpu.memory_space<semaphore_mem>> -> memref<1x!tpu.dma_semaphore, #tpu.memory_space<semaphore_mem>>
    %13 = tpu.memref_squeeze %12 : memref<1x!tpu.dma_semaphore, #tpu.memory_space<semaphore_mem>> -> memref<!tpu.dma_semaphore, #tpu.memory_space<semaphore_mem>>
    tpu.enqueue_dma source(%arg4 : memref<16x128xf32, #tpu.memory_space<vmem>>) target(%11 : memref<16x128xf32, #tpu.memory_space<any>>) target_semaphore(%13 : memref<!tpu.dma_semaphore, #tpu.memory_space<semaphore_mem>>)
    %c3_i32 = arith.constant 3 : i32
    %c3_i32_12 = arith.constant 3 : i32
    %c1_i32_13 = arith.constant 1 : i32
    %c0_i32_14 = arith.constant 0 : i32
    %14 = tpu.memref_slice %arg3[%c3_i32, %c1_i32_13, %c0_i32_14] : memref<4x32x128xf32, #tpu.memory_space<any>> -> memref<1x16x128xf32, #tpu.memory_space<any>>
    %15 = tpu.memref_squeeze %14 : memref<1x16x128xf32, #tpu.memory_space<any>> -> memref<16x128xf32, #tpu.memory_space<any>>
    %16 = tpu.memref_slice %arg5[%c3_i32_12] : memref<4x!tpu.dma_semaphore, #tpu.memory_space<semaphore_mem>> -> memref<1x!tpu.dma_semaphore, #tpu.memory_space<semaphore_mem>>
    %17 = tpu.memref_squeeze %16 : memref<1x!tpu.dma_semaphore, #tpu.memory_space<semaphore_mem>> -> memref<!tpu.dma_semaphore, #tpu.memory_space<semaphore_mem>>
    tpu.enqueue_dma source(%arg4 : memref<16x128xf32, #tpu.memory_space<vmem>>) target(%15 : memref<16x128xf32, #tpu.memory_space<any>>) target_semaphore(%17 : memref<!tpu.dma_semaphore, #tpu.memory_space<semaphore_mem>>)
    %c0_i32_15 = arith.constant 0 : i32
    %c0_i32_16 = arith.constant 0 : i32
    %c1_i32_17 = arith.constant 1 : i32
    %c0_i32_18 = arith.constant 0 : i32
    %18 = tpu.memref_slice %arg3[%c0_i32_15, %c1_i32_17, %c0_i32_18] : memref<4x32x128xf32, #tpu.memory_space<any>> -> memref<1x16x128xf32, #tpu.memory_space<any>>
    %19 = tpu.memref_squeeze %18 : memref<1x16x128xf32, #tpu.memory_space<any>> -> memref<16x128xf32, #tpu.memory_space<any>>
    %20 = tpu.memref_slice %arg5[%c0_i32_16] : memref<4x!tpu.dma_semaphore, #tpu.memory_space<semaphore_mem>> -> memref<1x!tpu.dma_semaphore, #tpu.memory_space<semaphore_mem>>
    %21 = tpu.memref_squeeze %20 : memref<1x!tpu.dma_semaphore, #tpu.memory_space<semaphore_mem>> -> memref<!tpu.dma_semaphore, #tpu.memory_space<semaphore_mem>>
    tpu.wait_dma2 semaphore(%21 : memref<!tpu.dma_semaphore, #tpu.memory_space<semaphore_mem>>) src(%arg4 : memref<16x128xf32, #tpu.memory_space<vmem>>) dst(%19 : memref<16x128xf32, #tpu.memory_space<any>>)
    %c1_i32_19 = arith.constant 1 : i32
    %c1_i32_20 = arith.constant 1 : i32
    %c1_i32_21 = arith.constant 1 : i32
    %c0_i32_22 = arith.constant 0 : i32
    %22 = tpu.memref_slice %arg3[%c1_i32_19, %c1_i32_21, %c0_i32_22] : memref<4x32x128xf32, #tpu.memory_space<any>> -> memref<1x16x128xf32, #tpu.memory_space<any>>
    %23 = tpu.memref_squeeze %22 : memref<1x16x128xf32, #tpu.memory_space<any>> -> memref<16x128xf32, #tpu.memory_space<any>>
    %24 = tpu.memref_slice %arg5[%c1_i32_20] : memref<4x!tpu.dma_semaphore, #tpu.memory_space<semaphore_mem>> -> memref<1x!tpu.dma_semaphore, #tpu.memory_space<semaphore_mem>>
    %25 = tpu.memref_squeeze %24 : memref<1x!tpu.dma_semaphore, #tpu.memory_space<semaphore_mem>> -> memref<!tpu.dma_semaphore, #tpu.memory_space<semaphore_mem>>
    tpu.wait_dma2 semaphore(%25 : memref<!tpu.dma_semaphore, #tpu.memory_space<semaphore_mem>>) src(%arg4 : memref<16x128xf32, #tpu.memory_space<vmem>>) dst(%23 : memref<16x128xf32, #tpu.memory_space<any>>)
    %c2_i32_23 = arith.constant 2 : i32
    %c2_i32_24 = arith.constant 2 : i32
    %c1_i32_25 = arith.constant 1 : i32
    %c0_i32_26 = arith.constant 0 : i32
    %26 = tpu.memref_slice %arg3[%c2_i32_23, %c1_i32_25, %c0_i32_26] : memref<4x32x128xf32, #tpu.memory_space<any>> -> memref<1x16x128xf32, #tpu.memory_space<any>>
    %27 = tpu.memref_squeeze %26 : memref<1x16x128xf32, #tpu.memory_space<any>> -> memref<16x128xf32, #tpu.memory_space<any>>
    %28 = tpu.memref_slice %arg5[%c2_i32_24] : memref<4x!tpu.dma_semaphore, #tpu.memory_space<semaphore_mem>> -> memref<1x!tpu.dma_semaphore, #tpu.memory_space<semaphore_mem>>
    %29 = tpu.memref_squeeze %28 : memref<1x!tpu.dma_semaphore, #tpu.memory_space<semaphore_mem>> -> memref<!tpu.dma_semaphore, #tpu.memory_space<semaphore_mem>>
    tpu.wait_dma2 semaphore(%29 : memref<!tpu.dma_semaphore, #tpu.memory_space<semaphore_mem>>) src(%arg4 : memref<16x128xf32, #tpu.memory_space<vmem>>) dst(%27 : memref<16x128xf32, #tpu.memory_space<any>>)
    %c3_i32_27 = arith.constant 3 : i32
    %c3_i32_28 = arith.constant 3 : i32
    %c1_i32_29 = arith.constant 1 : i32
    %c0_i32_30 = arith.constant 0 : i32
    %30 = tpu.memref_slice %arg3[%c3_i32_27, %c1_i32_29, %c0_i32_30] : memref<4x32x128xf32, #tpu.memory_space<any>> -> memref<1x16x128xf32, #tpu.memory_space<any>>
    %31 = tpu.memref_squeeze %30 : memref<1x16x128xf32, #tpu.memory_space<any>> -> memref<16x128xf32, #tpu.memory_space<any>>
    %32 = tpu.memref_slice %arg5[%c3_i32_28] : memref<4x!tpu.dma_semaphore, #tpu.memory_space<semaphore_mem>> -> memref<1x!tpu.dma_semaphore, #tpu.memory_space<semaphore_mem>>
    %33 = tpu.memref_squeeze %32 : memref<1x!tpu.dma_semaphore, #tpu.memory_space<semaphore_mem>> -> memref<!tpu.dma_semaphore, #tpu.memory_space<semaphore_mem>>
    tpu.wait_dma2 semaphore(%33 : memref<!tpu.dma_semaphore, #tpu.memory_space<semaphore_mem>>) src(%arg4 : memref<16x128xf32, #tpu.memory_space<vmem>>) dst(%31 : memref<16x128xf32, #tpu.memory_space<any>>)
    return
  }
  func.func @transform_0(%arg0: i32) -> (i32, i32) {
    %c0_i32 = arith.constant 0 : i32
    %c0_i32_0 = arith.constant 0 : i32
    %c0_i32_1 = arith.constant 0 : i32
    return %c0_i32, %c0_i32_0 : i32, i32
  }
}

</mosaic_0001>

<llo_original>
// kernel: prompt_learner_forward.1
$region0: #{prompt_learner_forward.1}
  #allocation0 [shape = 'u32[]', space=smem, size = 0x4, offset = 0x4, fixed_abs, tag = 'smem constant byte address 0x4 - core index']
  #allocation1 [shape = 'u32[144,128]{1,0:T(1,128)}', space=vmem, size = 0x12000, scoped, tag = 'internal scratch']
  #allocation2 [shape = 'f32[16,128]{1,0:T(8,128)}', space=vmem, size = 0x2000, scoped, tag = 'scratch operand']
  #allocation3 [shape = 's32[4]{0}', space=sflag, size = 0x10, scoped, tag = 'scratch operand']
  #allocation6 [shape = 's32[]', space=sflag, size = 0x4, offset = 0, fixed_abs, tag = 'sflag constant byte address 0x0 - dummy sync flag']
  #allocation7 [shape = 's32[]', space=sflag, size = 0x4, offset = 0, fixed_abs, tag = 'sflag constant byte address 0x0 - dummy sync flag']
  #allocation8 [shape = 'u32[]', space=smem, size = 0x4, offset = 0x44, fixed_abs, tag = 'smem constant byte address 0x44 - assertion arg 0']
  #allocation9 [shape = 'u32[]', space=smem, size = 0x4, offset = 0x48, fixed_abs, tag = 'smem constant byte address 0x48 - assertion arg 1']
  #allocation10 [shape = 's32[]', space=sflag, size = 0x4, offset = 0, fixed_abs, tag = 'sflag constant byte address 0x0 - dummy sync flag']
  #allocation11 [shape = 's32[]', space=sflag, size = 0x4, offset = 0, fixed_abs, tag = 'sflag constant byte address 0x0 - dummy sync flag']
  #allocation12 [shape = 's32[]', space=sflag, size = 0x4, offset = 0, fixed_abs, tag = 'sflag constant byte address 0x0 - dummy sync flag']
  #allocation13 [shape = 's32[]', space=sflag, size = 0x4, offset = 0, fixed_abs, tag = 'sflag constant byte address 0x0 - dummy sync flag']
  #allocation14 [shape = 's32[]', space=sflag, size = 0x4, offset = 0, fixed_abs, tag = 'sflag constant byte address 0x0 - dummy sync flag']
  #allocation15 [shape = 's32[]', space=sflag, size = 0x4, offset = 0, fixed_abs, tag = 'sflag constant byte address 0x0 - dummy sync flag']
  %s0 = inlined_call_operand.hbm [shape: f32[16,128], index: 0, kind: input, shape index: {}]
  %s1 = inlined_call_operand.hbm [shape: f32[4,32,128], index: 1, kind: input, shape index: {}, may-alias: {1,2}]
  %s2 = inlined_call_operand.hbm [shape: f32[4,32,128], index: 2, kind: output, shape index: {}, may-alias: {1,2}]
  %s3 = sld [smem:[#allocation0]]
  $region26: #{prompt_learner_forward.1} parent=0
    _
  %s5 = ssub.s32 1, %s3
  %s6 = scalar_select 0, %s5, %s3
  $region1: #{prompt_learner_forward.1} parent=0
    #allocation4 [shape = 'u8[8192]{0}', space=vmem, size = 0x2000, scoped, tag = 'input window, operand 0, single buffered']
    #allocation5 [shape = 's32[1]{0}', space=sflag, size = 0x4, scoped, tag = 'scoped memory for prompt_learner_forward.1']
    %7 = vsyncpa [#allocation5], 0
    // Predicated region
    $region2: #{prompt_learner_forward.1} parent=1 // pred_check
      _
    $region3: #{prompt_learner_forward.1} parent=1 // pred_check_branch
      %9 = sbr.rel (0) target = $region5
    $region4: #{prompt_learner_forward.1} parent=1 // pred_region
      %s11 = ssub.s32 256, 256
      %12 = vsyncadd [#allocation5], %s11
      %s13 = sshll.u32 [#allocation4], 4
      %s14 = int_to_ptr.vmem [resolvable:$true] %s13
      %19 = dma.hbm_to_vmem [thread:$0]  %s0, 256, %s14, [#allocation5], 128, 128, 8
    $region5: #{prompt_learner_forward.1} parent=1 // pred_fallthru
      _
    // Predicated region
    $region6: #{prompt_learner_forward.1} parent=1 // pred_check
      _
    $region7: #{prompt_learner_forward.1} parent=1 // pred_check_branch
      %21 = sbr.rel (0) target = $region9
    $region8: #{prompt_learner_forward.1} parent=1 // pred_region
      %22 = dma.done [#allocation5], 256
    $region9: #{prompt_learner_forward.1} parent=1 // pred_fallthru
      _
    %v23 = vld [vmem:[#allocation4] sm:$0xff]
    %v24 = vld [vmem:[#allocation4 + $0x8] sm:$0xff]
    %25 = vst [vmem:[#allocation2] sm:$0xff] %v23
    %26 = vst [vmem:[#allocation2 + $0x8] sm:$0xff] %v24
    %s27 = scalar_lea.hbm %s2, 16
    // Predicated region
    $region10: #{prompt_learner_forward.1} parent=1 // pred_check
      _
    $region11: #{prompt_learner_forward.1} parent=1 // pred_check_branch
      %29 = sbr.rel target = $region13
    $region12: #{prompt_learner_forward.1} parent=1 // pred_region
      %30 = sst [smem:[#allocation8]] [#allocation7]
      %31 = sst [smem:[#allocation9]] [#allocation6]
    $region13: #{prompt_learner_forward.1} parent=1 // pred_fallthru
      _
    %33 = shalt.err (0)
    %s35 = sshll.u32 [#allocation2], 4
    %s36 = int_to_ptr.vmem [resolvable:$true] %s35
    %38 = dma.vmem_to_hbm [thread:$0]  %s36, 256, %s27, [#allocation3]
    %s39 = scalar_lea.hbm %s2, 528
    %s40 = scalar_lea.sflag [#allocation3], 1
    // Predicated region
    $region14: #{prompt_learner_forward.1} parent=1 // pred_check
      _
    $region15: #{prompt_learner_forward.1} parent=1 // pred_check_branch
      %42 = sbr.rel target = $region17
    $region16: #{prompt_learner_forward.1} parent=1 // pred_region
      %43 = sst [smem:[#allocation8]] [#allocation11]
      %44 = sst [smem:[#allocation9]] [#allocation10]
    $region17: #{prompt_learner_forward.1} parent=1 // pred_fallthru
      _
    %46 = shalt.err (0)
    %s48 = sshll.u32 [#allocation2], 4
    %s49 = int_to_ptr.vmem [resolvable:$true] %s48
    %51 = dma.vmem_to_hbm [thread:$0]  %s49, 256, %s39, %s40
    %s52 = scalar_lea.hbm %s2, 1040
    %s53 = scalar_lea.sflag [#allocation3], 2
    // Predicated region
    $region18: #{prompt_learner_forward.1} parent=1 // pred_check
      _
    $region19: #{prompt_learner_forward.1} parent=1 // pred_check_branch
      %55 = sbr.rel target = $region21
    $region20: #{prompt_learner_forward.1} parent=1 // pred_region
      %56 = sst [smem:[#allocation8]] [#allocation13]
      %57 = sst [smem:[#allocation9]] [#allocation12]
    $region21: #{prompt_learner_forward.1} parent=1 // pred_fallthru
      _
    %59 = shalt.err (0)
    %s61 = sshll.u32 [#allocation2], 4
    %s62 = int_to_ptr.vmem [resolvable:$true] %s61
    %64 = dma.vmem_to_hbm [thread:$0]  %s62, 256, %s52, %s53
    %s65 = scalar_lea.hbm %s2, 1552
    %s66 = scalar_lea.sflag [#allocation3], 3
    // Predicated region
    $region22: #{prompt_learner_forward.1} parent=1 // pred_check
      _
    $region23: #{prompt_learner_forward.1} parent=1 // pred_check_branch
      %68 = sbr.rel target = $region25
    $region24: #{prompt_learner_forward.1} parent=1 // pred_region
      %69 = sst [smem:[#allocation8]] [#allocation15]
      %70 = sst [smem:[#allocation9]] [#allocation14]
    $region25: #{prompt_learner_forward.1} parent=1 // pred_fallthru
      _
    %72 = shalt.err (0)
    %s74 = sshll.u32 [#allocation2], 4
    %s75 = int_to_ptr.vmem [resolvable:$true] %s74
    %77 = dma.vmem_to_hbm [thread:$0]  %s75, 256, %s65, %s66
    %s78 = smul.u32 16, 1
    %s79 = sshll.u32 %s78, 4
    %80 = dma.done [#allocation3], %s79
    %s81 = sshll.u32 %s78, 4
    %82 = dma.done %s40, %s81
    %s83 = sshll.u32 %s78, 4
    %84 = dma.done %s53, %s83
    %s85 = sshll.u32 %s78, 4
    %86 = dma.done %s66, %s85
    %87 = vsyncpa [#allocation5], 1
  %88 = vsyncmov [#allocation3]
  %s89 = vpop.sfrf %88
  %p90 = scmp.eq.s32.totalorder %s89, 0
  %p91 = pneg %p90
  %93 = shalt.err (%p91)
  %s94 = scalar_lea.sflag [#allocation3], 1
  %95 = vsyncmov %s94
  %s96 = vpop.sfrf %95
  %p97 = scmp.eq.s32.totalorder %s96, 0
  %p98 = pneg %p97
  %100 = shalt.err (%p98)
  %s101 = scalar_lea.sflag [#allocation3], 2
  %102 = vsyncmov %s101
  %s103 = vpop.sfrf %102
  %p104 = scmp.eq.s32.totalorder %s103, 0
  %p105 = pneg %p104
  %107 = shalt.err (%p105)
  %s108 = scalar_lea.sflag [#allocation3], 3
  %109 = vsyncmov %s108
  %s110 = vpop.sfrf %109
  %p111 = scmp.eq.s32.totalorder %s110, 0
  %p112 = pneg %p111
  %114 = shalt.err (%p112)

</llo_original>
